<compile_context>
chip_gen: v7x
topology: tpu7x:2x2x1
jax: 0.10.0
libtpu: 0.0.40
codegen_flags: <defaults>
</compile_context>

<pallas_src>
import functools

import jax
import jax.numpy as jnp
from jax.experimental import pallas as pl
from jax.experimental.pallas import tpu as pltpu


def _round_up(x, m):
    return ((x + m - 1) // m) * m


def _cdiv(a, b):
    return (a + b - 1) // b


def prenorm_ffn_kernel(x_ref, g_ref, bta_ref, w1_ref, b1_ref, w2_ref, b2_ref,
                       o_ref, *, inv_dim, eps):
    # ---- LayerNorm over the true dim: f32 stats, centered two-pass variance ----
    x = x_ref[...].astype(jnp.float32)                       # (tm, dim)
    mean = jnp.sum(x, axis=-1, keepdims=True) * inv_dim
    xc = x - mean
    var = jnp.sum(xc * xc, axis=-1, keepdims=True) * inv_dim
    y = xc * jax.lax.rsqrt(var + eps)
    y = y * g_ref[...] + bta_ref[...]

    # ---- Linear(dim -> hidden) + SiLU : bf16 operands, f32 accumulation ----
    h = jnp.dot(y.astype(jnp.bfloat16), w1_ref[...],
                preferred_element_type=jnp.float32)
    h = h + b1_ref[...]
    h = h * jax.nn.sigmoid(h)                                 # SiLU in f32

    # ---- Linear(hidden -> dim) ----
    out = jnp.dot(h.astype(jnp.bfloat16), w2_ref[...],
                  preferred_element_type=jnp.float32)
    out = out + b2_ref[...]
    o_ref[...] = out.astype(o_ref.dtype)


def prepare_prenorm_ffn_params(gamma, beta, w1, b1, w2, b2):
    """Cast / reshape parameters once; cache the returned pytree across calls.

    w1: (dim, hidden), w2: (hidden, dim) — i.e. PyTorch weight matrices transposed.
    """
    f32 = jnp.float32
    return {
        "gamma": gamma.astype(f32).reshape(1, -1),
        "beta": beta.astype(f32).reshape(1, -1),
        "w1": w1.astype(jnp.bfloat16),
        "b1": b1.astype(f32).reshape(1, -1),
        "w2": w2.astype(jnp.bfloat16),
        "b2": b2.astype(f32).reshape(1, -1),
    }


@functools.partial(jax.jit, static_argnames=("eps", "tm_max", "out_dtype"))
def prenorm_ffn_pallas(x, params, *, eps=1e-5, tm_max=1024, out_dtype=jnp.bfloat16):
    """x: (..., dim) -> (..., dim) in `out_dtype` (bf16 by default; the kernel is
    HBM-bandwidth bound and the output is its largest stream)."""
    dim = x.shape[-1]
    hidden = params["w1"].shape[1]
    M = x.size // dim
    out_bytes = jnp.dtype(out_dtype).itemsize

    # ---- Row tiling: balanced tiles (bounded row-padding waste), multiples of 16 ----
    tm = _round_up(_cdiv(M, max(1, _cdiv(M, tm_max))), 16)
    # At least 2 grid steps when possible so ("parallel",) can shard across both
    # v7x TensorCores (harmless on v5e/v6e).
    while _round_up(M, tm) // tm < 2 and tm > 16:
        tm = _round_up(tm // 2, 16)

    # ---- Per-generation VMEM budget with headroom below physical capacity ----
    try:
        vmem_cap = pltpu.get_tpu_info().vmem_capacity_bytes
    except Exception:
        vmem_cap = 64 * 1024 * 1024          # conservative: v7x per-core VMEM
    vmem_budget = (vmem_cap * 3) // 4        # leave room for compiler scratch / sems

    def vmem_est(tm_):
        streamed = 2 * tm_ * dim * (2 + out_bytes)        # x in / out, double-buffered
        weights = 2 * 2 * (dim * hidden) * 2              # W1 + W2 bf16, 2 buffers each
        small = 2 * (3 * dim + hidden) * 4                # gamma/beta/b1/b2 (f32)
        temps = tm_ * (3 * dim + hidden) * 4              # f32 x, y, out + h temporaries
        return streamed + weights + small + temps

    # Shrink the tile instead of blowing past the budget (v7x safety).
    while vmem_est(tm) > vmem_budget and tm > 16:
        tm = _round_up(tm // 2, 16)

    M_p = _round_up(M, tm)
    grid = (M_p // tm,)

    # ---- Streamed input: cast to bf16 *before* padding (single fused copy) ----
    x2 = x.reshape(M, dim).astype(jnp.bfloat16)
    if M_p != M:
        x2 = jnp.pad(x2, ((0, M_p - M), (0, 0)))

    kernel = functools.partial(prenorm_ffn_kernel, inv_dim=1.0 / dim, eps=eps)

    # Advisory cost estimate for XLA's scheduler.
    flops = 4 * M_p * dim * hidden                         # two matmuls
    transcendentals = M_p * hidden + M_p                   # sigmoid + rsqrt
    bytes_accessed = (x2.size * 2 + M_p * dim * out_bytes  # x in (bf16) + out
                      + 2 * dim * hidden * 2               # W1 + W2 (bf16)
                      + (3 * dim + hidden) * 4)            # gamma/beta/biases (f32)
    cost = pl.CostEstimate(flops=int(flops),
                           transcendentals=int(transcendentals),
                           bytes_accessed=int(bytes_accessed))

    compiler_kwargs = dict(dimension_semantics=("parallel",))
    est = vmem_est(tm)
    if est > 12 * 1024 * 1024:   # only raise above v5e's conservative scoped default
        compiler_kwargs["vmem_limit_bytes"] = int(min((est * 3) // 2, vmem_budget))

    out2 = pl.pallas_call(
        kernel,
        out_shape=jax.ShapeDtypeStruct((M_p, dim), out_dtype),
        grid_spec=pltpu.PrefetchScalarGridSpec(
            num_scalar_prefetch=0,
            grid=grid,
            in_specs=[
                pl.BlockSpec((tm, dim), lambda i: (i, 0)),        # x tile (streamed)
                pl.BlockSpec((1, dim), lambda i: (0, 0)),         # gamma (resident)
                pl.BlockSpec((1, dim), lambda i: (0, 0)),         # beta
                pl.BlockSpec((dim, hidden), lambda i: (0, 0)),    # W1 (resident)
                pl.BlockSpec((1, hidden), lambda i: (0, 0)),      # b1
                pl.BlockSpec((hidden, dim), lambda i: (0, 0)),    # W2 (resident)
                pl.BlockSpec((1, dim), lambda i: (0, 0)),         # b2
            ],
            out_specs=pl.BlockSpec((tm, dim), lambda i: (i, 0)),
        ),
        compiler_params=pltpu.CompilerParams(**compiler_kwargs),
        cost_estimate=cost,
    )(x2, params["gamma"], params["beta"], params["w1"], params["b1"],
      params["w2"], params["b2"])

    return out2[:M].reshape(x.shape)


def prenorm_ffn_reference(x, gamma, beta, w1, b1, w2, b2, eps=1e-5):
    mean = jnp.mean(x, axis=-1, keepdims=True)
    var = jnp.mean((x - mean) ** 2, axis=-1, keepdims=True)
    y = (x - mean) * jax.lax.rsqrt(var + eps)
    y = y * gamma + beta
    h = jnp.dot(y, w1) + b1
    h = h * jax.nn.sigmoid(h)
    return jnp.dot(h, w2) + b2


if __name__ == "__main__":
    # MobileViT-style token tensor: (batch, patch_area, tokens, dim), hidden = 2*dim.
    B, P, N, dim, hidden = 2, 4, 16, 32, 64

    key = jax.random.PRNGKey(0)
    kx, kg, kb, kw1, kb1, kw2, kb2 = jax.random.split(key, 7)

    x = jax.random.normal(kx, (B, P, N, dim), dtype=jnp.float32)
    # LayerNorm affine params (PyTorch init is gamma=1, beta=0; perturb to exercise them).
    gamma = 1.0 + 0.1 * jax.random.normal(kg, (dim,), dtype=jnp.float32)
    beta = 0.1 * jax.random.normal(kb, (dim,), dtype=jnp.float32)
    # Deterministic FFN parameter init (PyTorch-style uniform bounds, synthetic).
    lim1 = 1.0 / (dim ** 0.5)
    lim2 = 1.0 / (hidden ** 0.5)
    w1 = jax.random.uniform(kw1, (dim, hidden), jnp.float32, -lim1, lim1)
    b1 = jax.random.uniform(kb1, (hidden,), jnp.float32, -lim1, lim1)
    w2 = jax.random.uniform(kw2, (hidden, dim), jnp.float32, -lim2, lim2)
    b2 = jax.random.uniform(kb2, (dim,), jnp.float32, -lim2, lim2)

    # Parameters are prepared (cast / reshaped) once and reused across calls.
    params = prepare_prenorm_ffn_params(gamma, beta, w1, b1, w2, b2)

    out = prenorm_ffn_pallas(x, params)
    out = jax.block_until_ready(out)

    ref = prenorm_ffn_reference(x, gamma, beta, w1, b1, w2, b2)
    assert out.shape == x.shape
    # bf16 input / weights / output with f32 accumulation vs full-f32 reference.
    err = float(jnp.max(jnp.abs(out.astype(jnp.float32) - ref)))
    assert err < 5e-2, err

    print("KERNEL_OK")
</pallas_src>

<mosaic_0001>
module attributes {stable_mosaic.version = 11 : i64} {
  func.func @prenorm_ffn_kernel(%arg0: i32, %arg1: memref<64x32xbf16, #tpu.memory_space<vmem>>, %arg2: memref<1x32xf32, #tpu.memory_space<vmem>>, %arg3: memref<1x32xf32, #tpu.memory_space<vmem>>, %arg4: memref<32x64xbf16, #tpu.memory_space<vmem>>, %arg5: memref<1x64xf32, #tpu.memory_space<vmem>>, %arg6: memref<64x32xbf16, #tpu.memory_space<vmem>>, %arg7: memref<1x32xf32, #tpu.memory_space<vmem>>, %arg8: memref<64x32xbf16, #tpu.memory_space<vmem>>) attributes {dimension_semantics = [#tpu.dimension_semantics<parallel>], iteration_bounds = array<i64: 2>, scalar_prefetch = 0 : i64, scratch_operands = 0 : i64, tpu.core_type = #tpu.core_type<tc>, window_params = [{transform_indices = @transform_0, window_bounds = array<i64: 64, 32>}, {pipeline_mode = #tpu.pipeline_mode<synchronous>, transform_indices = @transform_1, window_bounds = array<i64: 1, 32>}, {pipeline_mode = #tpu.pipeline_mode<synchronous>, transform_indices = @transform_2, window_bounds = array<i64: 1, 32>}, {pipeline_mode = #tpu.pipeline_mode<synchronous>, transform_indices = @transform_3, window_bounds = array<i64: 32, 64>}, {pipeline_mode = #tpu.pipeline_mode<synchronous>, transform_indices = @transform_4, window_bounds = array<i64: 1, 64>}, {pipeline_mode = #tpu.pipeline_mode<synchronous>, transform_indices = @transform_5, window_bounds = array<i64: 64, 32>}, {pipeline_mode = #tpu.pipeline_mode<synchronous>, transform_indices = @transform_6, window_bounds = array<i64: 1, 32>}, {transform_indices = @transform_7, window_bounds = array<i64: 64, 32>}]} {
    %c0 = arith.constant 0 : index
    %c0_0 = arith.constant 0 : index
    %0 = vector.load %arg1[%c0, %c0_0] : memref<64x32xbf16, #tpu.memory_space<vmem>>, vector<64x32xbf16>
    %1 = arith.extf %0 : vector<64x32xbf16> to vector<64x32xf32>
    %cst = arith.constant dense<0.000000e+00> : vector<64xf32>
    %2 = vector.multi_reduction <add>, %1, %cst [1] : vector<64x32xf32> to vector<64xf32>
    %3 = vector.shape_cast %2 : vector<64xf32> to vector<64x1xf32>
    %cst_1 = arith.constant 3.125000e-02 : f32
    %4 = vector.broadcast %cst_1 : f32 to vector<64x1xf32>
    %5 = arith.mulf %3, %4 : vector<64x1xf32>
    %6 = vector.broadcast %5 : vector<64x1xf32> to vector<64x32xf32>
    %7 = arith.subf %1, %6 : vector<64x32xf32>
    %8 = arith.mulf %7, %7 : vector<64x32xf32>
    %cst_2 = arith.constant dense<0.000000e+00> : vector<64xf32>
    %9 = vector.multi_reduction <add>, %8, %cst_2 [1] : vector<64x32xf32> to vector<64xf32>
    %10 = vector.shape_cast %9 : vector<64xf32> to vector<64x1xf32>
    %cst_3 = arith.constant 3.125000e-02 : f32
    %11 = vector.broadcast %cst_3 : f32 to vector<64x1xf32>
    %12 = arith.mulf %10, %11 : vector<64x1xf32>
    %cst_4 = arith.constant 9.99999974E-6 : f32
    %13 = vector.broadcast %cst_4 : f32 to vector<64x1xf32>
    %14 = arith.addf %12, %13 : vector<64x1xf32>
    %15 = math.rsqrt %14 : vector<64x1xf32>
    %16 = vector.broadcast %15 : vector<64x1xf32> to vector<64x32xf32>
    %17 = arith.mulf %7, %16 : vector<64x32xf32>
    %c0_5 = arith.constant 0 : index
    %c0_6 = arith.constant 0 : index
    %18 = vector.load %arg2[%c0_5, %c0_6] : memref<1x32xf32, #tpu.memory_space<vmem>>, vector<1x32xf32>
    %19 = vector.broadcast %18 : vector<1x32xf32> to vector<64x32xf32>
    %20 = arith.mulf %17, %19 : vector<64x32xf32>
    %c0_7 = arith.constant 0 : index
    %c0_8 = arith.constant 0 : index
    %21 = vector.load %arg3[%c0_7, %c0_8] : memref<1x32xf32, #tpu.memory_space<vmem>>, vector<1x32xf32>
    %22 = vector.broadcast %21 : vector<1x32xf32> to vector<64x32xf32>
    %23 = arith.addf %20, %22 : vector<64x32xf32>
    %24 = arith.truncf %23 : vector<64x32xf32> to vector<64x32xbf16>
    %c0_9 = arith.constant 0 : index
    %c0_10 = arith.constant 0 : index
    %25 = vector.load %arg4[%c0_9, %c0_10] : memref<32x64xbf16, #tpu.memory_space<vmem>>, vector<32x64xbf16>
    %cst_11 = arith.constant dense<0.000000e+00> : vector<64x64xf32>
    %26 = tpu.matmul %24, %25, %cst_11 {dimension_numbers = #tpu.dot_dimension_numbers<[1], [0], [0], [1], [0, 0, 1, 1], [], []>} : vector<64x32xbf16>, vector<32x64xbf16>, vector<64x64xf32> -> vector<64x64xf32>
    %c0_12 = arith.constant 0 : index
    %c0_13 = arith.constant 0 : index
    %27 = vector.load %arg5[%c0_12, %c0_13] : memref<1x64xf32, #tpu.memory_space<vmem>>, vector<1x64xf32>
    %28 = vector.broadcast %27 : vector<1x64xf32> to vector<64x64xf32>
    %29 = arith.addf %26, %28 : vector<64x64xf32>
    %30 = arith.negf %29 : vector<64x64xf32>
    %31 = math.exp %30 : vector<64x64xf32>
    %cst_14 = arith.constant 1.000000e+00 : f32
    %32 = vector.broadcast %cst_14 : f32 to vector<64x64xf32>
    %33 = arith.addf %32, %31 : vector<64x64xf32>
    %34 = arith.divf %32, %33 : vector<64x64xf32>
    %35 = arith.mulf %29, %34 : vector<64x64xf32>
    %36 = arith.truncf %35 : vector<64x64xf32> to vector<64x64xbf16>
    %c0_15 = arith.constant 0 : index
    %c0_16 = arith.constant 0 : index
    %37 = vector.load %arg6[%c0_15, %c0_16] : memref<64x32xbf16, #tpu.memory_space<vmem>>, vector<64x32xbf16>
    %cst_17 = arith.constant dense<0.000000e+00> : vector<64x32xf32>
    %38 = tpu.matmul %36, %37, %cst_17 {dimension_numbers = #tpu.dot_dimension_numbers<[1], [0], [0], [1], [0, 0, 1, 1], [], []>} : vector<64x64xbf16>, vector<64x32xbf16>, vector<64x32xf32> -> vector<64x32xf32>
    %c0_18 = arith.constant 0 : index
    %c0_19 = arith.constant 0 : index
    %39 = vector.load %arg7[%c0_18, %c0_19] : memref<1x32xf32, #tpu.memory_space<vmem>>, vector<1x32xf32>
    %40 = vector.broadcast %39 : vector<1x32xf32> to vector<64x32xf32>
    %41 = arith.addf %38, %40 : vector<64x32xf32>
    %42 = arith.truncf %41 : vector<64x32xf32> to vector<64x32xbf16>
    %c0_20 = arith.constant 0 : index
    %c0_21 = arith.constant 0 : index
    %43 = vector.load %arg8[%c0_20, %c0_21] : memref<64x32xbf16, #tpu.memory_space<vmem>>, vector<64x32xbf16>
    tpu.vector_store %arg8[%c0_20, %c0_21], %42 {strides = array<i32>} : memref<64x32xbf16, #tpu.memory_space<vmem>>, vector<64x32xbf16>,
    return
  }
  func.func @transform_0(%arg0: i32) -> (i32, i32) {
    %c0_i32 = arith.constant 0 : i32
    %c0_i32_0 = arith.constant 0 : i32
    return %arg0, %c0_i32 : i32, i32
  }
  func.func @transform_1(%arg0: i32) -> (i32, i32) {
    %c0_i32 = arith.constant 0 : i32
    %c0_i32_0 = arith.constant 0 : i32
    %c0_i32_1 = arith.constant 0 : i32
    return %c0_i32, %c0_i32_0 : i32, i32
  }
  func.func @transform_2(%arg0: i32) -> (i32, i32) {
    %c0_i32 = arith.constant 0 : i32
    %c0_i32_0 = arith.constant 0 : i32
    %c0_i32_1 = arith.constant 0 : i32
    return %c0_i32, %c0_i32_0 : i32, i32
  }
  func.func @transform_3(%arg0: i32) -> (i32, i32) {
    %c0_i32 = arith.constant 0 : i32
    %c0_i32_0 = arith.constant 0 : i32
    %c0_i32_1 = arith.constant 0 : i32
    return %c0_i32, %c0_i32_0 : i32, i32
  }
  func.func @transform_4(%arg0: i32) -> (i32, i32) {
    %c0_i32 = arith.constant 0 : i32
    %c0_i32_0 = arith.constant 0 : i32
    %c0_i32_1 = arith.constant 0 : i32
    return %c0_i32, %c0_i32_0 : i32, i32
  }
  func.func @transform_5(%arg0: i32) -> (i32, i32) {
    %c0_i32 = arith.constant 0 : i32
    %c0_i32_0 = arith.constant 0 : i32
    %c0_i32_1 = arith.constant 0 : i32
    return %c0_i32, %c0_i32_0 : i32, i32
  }
  func.func @transform_6(%arg0: i32) -> (i32, i32) {
    %c0_i32 = arith.constant 0 : i32
    %c0_i32_0 = arith.constant 0 : i32
    %c0_i32_1 = arith.constant 0 : i32
    return %c0_i32, %c0_i32_0 : i32, i32
  }
  func.func @transform_7(%arg0: i32) -> (i32, i32) {
    %c0_i32 = arith.constant 0 : i32
    %c0_i32_0 = arith.constant 0 : i32
    return %arg0, %c0_i32 : i32, i32
  }
}

</mosaic_0001>

<llo_original>
// kernel: prenorm_ffn_pallas.1
$region0: #{prenorm_ffn_pallas.1}
  #allocation0 [shape = 'u32[]', space=smem, size = 0x4, offset = 0x4, fixed_abs, tag = 'smem constant byte address 0x4 - core index']
  #allocation1 [shape = 'u32[144,128]{1,0:T(1,128)}', space=vmem, size = 0x12000, scoped, tag = 'internal scratch']
  %s0 = inlined_call_operand.vmem [shape: bf16[128,32], index: 0, kind: input, shape index: {}]
  %s1 = inlined_call_operand.vmem [shape: f32[1,32], index: 1, kind: input, shape index: {}]
  %s2 = inlined_call_operand.vmem [shape: f32[1,32], index: 2, kind: input, shape index: {}]
  %s3 = inlined_call_operand.vmem [shape: bf16[32,64], index: 3, kind: input, shape index: {}]
  %s4 = inlined_call_operand.vmem [shape: f32[1,64], index: 4, kind: input, shape index: {}]
  %s5 = inlined_call_operand.vmem [shape: bf16[64,32], index: 5, kind: input, shape index: {}]
  %s6 = inlined_call_operand.vmem [shape: f32[1,32], index: 6, kind: input, shape index: {}]
  %s7 = inlined_call_operand.hbm [shape: bf16[128,32], index: 7, kind: output, shape index: {}]
  %s8 = sld [smem:[#allocation0]]
  $region61: #{prenorm_ffn_pallas.1} parent=0
    _
  %s10 = ssub.s32 1, %s8
  %s11 = scalar_select 0, %s10, %s8
  $region1: #{prenorm_ffn_pallas.1} parent=0
    #allocation2 [shape = 'u8[32768]{0}', space=vmem, size = 0x8000, scoped, tag = 'output window, operand 0']
    #allocation3 [shape = 's32[2]{0}', space=sflag, size = 0x8, scoped, tag = 'scoped memory for prenorm_ffn_pallas.1']
    %12 = vsyncpa [#allocation3], 0
    %s13 = scalar_lea.sflag [#allocation3], 1
    %14 = vsyncpa %s13, 0
    loop: start=0, step=1, limit=4
    $region2: #{prenorm_ffn_pallas.1} parent=1 // loop_pre_header
      _
    $region3: #{prenorm_ffn_pallas.1} parent=1 // loop_header
      %s16 = sphi 0, %s20
      %p17 = scmp.ge.s32.totalorder %s16, 4
      %s26 = sphi 0, %s28
      %s29 = sphi 0, %s26
      %s30 = sphi 0, %s29
      %s46 = sphi 0, %s30
      %s50 = sphi 0, %s50
      %s52 = sphi 0, %s50
      %s53 = sphi 0, %s52
      %s67 = sphi 0, %s53
      %s71 = sphi 0, %s71
      %s73 = sphi 0, %s71
      %s74 = sphi 0, %s73
      %s88 = sphi 0, %s74
      %s92 = sphi 0, %s92
      %s94 = sphi 0, %s92
      %s95 = sphi 0, %s94
      %s109 = sphi 0, %s95
      %s113 = sphi 0, %s113
      %s115 = sphi 0, %s113
      %s116 = sphi 0, %s115
      %s130 = sphi 0, %s116
      %s134 = sphi 0, %s134
      %s136 = sphi 0, %s134
      %s137 = sphi 0, %s136
      %s151 = sphi 0, %s137
      %s155 = sphi 0, %s155
      %s157 = sphi 0, %s155
      %s158 = sphi 0, %s157
      %s172 = sphi 0, %s158
      %s178 = sphi 0, %s180
      %s181 = sphi 0, %s178
      %s182 = sphi 0, %s181
      %s198 = sphi 0, %s182
    $region4: #{prenorm_ffn_pallas.1} parent=1 // loop_header_branch
      %19 = sbr.rel (%p17) target = $region8
    $region5: #{prenorm_ffn_pallas.1} parent=1 // loop_body
      %s21 = ssub.s32 %s16, 1
      %s22 = ssub.s32 %s16, 2
      %s23 = sadd.s32 %s16, 1
      %s24 = ssub.s32 %s16, %s23
      %p25 = scmp.eq.s32.totalorder %s24, 0
      %s27 = sadd.s32 %s26, 1
      %s28 = scalar_select %p25, %s26, %s27
      %p31 = pneg %p25
      %p32 = scmp.eq.s32.totalorder %s16, 1
      %p33 = por %p31, %p32
      %p34 = scmp.ne.s32.totalorder %s26, %s29
      %p35 = scmp.eq.s32.totalorder %s16, 0
      %p36 = por %p34, %p35
      %p37 = scmp.ne.s32.totalorder %s26, %s29
      %p38 = scmp.eq.s32.totalorder %s21, 1
      %p39 = por %p37, %p38
      %p40 = scmp.ne.s32.totalorder %s29, %s30
      %p41 = scmp.eq.s32.totalorder %s21, 0
      %p42 = por %p40, %p41
      %p43 = scmp.ne.s32.totalorder %s29, %s30
      %p44 = scmp.eq.s32.totalorder %s22, 1
      %p45 = por %p43, %p44
      %p47 = scmp.ne.s32.totalorder %s30, %s46
      %p48 = scmp.eq.s32.totalorder %s22, 0
      %p49 = por %p47, %p48
      %s51 = sadd.s32 %s50, 1
      %p54 = scmp.eq.s32.totalorder %s16, 1
      %p55 = scmp.ne.s32.totalorder %s50, %s52
      %p56 = scmp.eq.s32.totalorder %s16, 0
      %p57 = por %p55, %p56
      %p58 = scmp.ne.s32.totalorder %s50, %s52
      %p59 = scmp.eq.s32.totalorder %s21, 1
      %p60 = por %p58, %p59
      %p61 = scmp.ne.s32.totalorder %s52, %s53
      %p62 = scmp.eq.s32.totalorder %s21, 0
      %p63 = por %p61, %p62
      %p64 = scmp.ne.s32.totalorder %s52, %s53
      %p65 = scmp.eq.s32.totalorder %s22, 1
      %p66 = por %p64, %p65
      %p68 = scmp.ne.s32.totalorder %s53, %s67
      %p69 = scmp.eq.s32.totalorder %s22, 0
      %p70 = por %p68, %p69
      %s72 = sadd.s32 %s71, 1
      %p75 = scmp.eq.s32.totalorder %s16, 1
      %p76 = scmp.ne.s32.totalorder %s71, %s73
      %p77 = scmp.eq.s32.totalorder %s16, 0
      %p78 = por %p76, %p77
      %p79 = scmp.ne.s32.totalorder %s71, %s73
      %p80 = scmp.eq.s32.totalorder %s21, 1
      %p81 = por %p79, %p80
      %p82 = scmp.ne.s32.totalorder %s73, %s74
      %p83 = scmp.eq.s32.totalorder %s21, 0
      %p84 = por %p82, %p83
      %p85 = scmp.ne.s32.totalorder %s73, %s74
      %p86 = scmp.eq.s32.totalorder %s22, 1
      %p87 = por %p85, %p86
      %p89 = scmp.ne.s32.totalorder %s74, %s88
      %p90 = scmp.eq.s32.totalorder %s22, 0
      %p91 = por %p89, %p90
      %s93 = sadd.s32 %s92, 1
      %p96 = scmp.eq.s32.totalorder %s16, 1
      %p97 = scmp.ne.s32.totalorder %s92, %s94
      %p98 = scmp.eq.s32.totalorder %s16, 0
      %p99 = por %p97, %p98
      %p100 = scmp.ne.s32.totalorder %s92, %s94
      %p101 = scmp.eq.s32.totalorder %s21, 1
      %p102 = por %p100, %p101
      %p103 = scmp.ne.s32.totalorder %s94, %s95
      %p104 = scmp.eq.s32.totalorder %s21, 0
      %p105 = por %p103, %p104
      %p106 = scmp.ne.s32.totalorder %s94, %s95
      %p107 = scmp.eq.s32.totalorder %s22, 1
      %p108 = por %p106, %p107
      %p110 = scmp.ne.s32.totalorder %s95, %s109
      %p111 = scmp.eq.s32.totalorder %s22, 0
      %p112 = por %p110, %p111
      %s114 = sadd.s32 %s113, 1
      %p117 = scmp.eq.s32.totalorder %s16, 1
      %p118 = scmp.ne.s32.totalorder %s113, %s115
      %p119 = scmp.eq.s32.totalorder %s16, 0
      %p120 = por %p118, %p119
      %p121 = scmp.ne.s32.totalorder %s113, %s115
      %p122 = scmp.eq.s32.totalorder %s21, 1
      %p123 = por %p121, %p122
      %p124 = scmp.ne.s32.totalorder %s115, %s116
      %p125 = scmp.eq.s32.totalorder %s21, 0
      %p126 = por %p124, %p125
      %p127 = scmp.ne.s32.totalorder %s115, %s116
      %p128 = scmp.eq.s32.totalorder %s22, 1
      %p129 = por %p127, %p128
      %p131 = scmp.ne.s32.totalorder %s116, %s130
      %p132 = scmp.eq.s32.totalorder %s22, 0
      %p133 = por %p131, %p132
      %s135 = sadd.s32 %s134, 1
      %p138 = scmp.eq.s32.totalorder %s16, 1
      %p139 = scmp.ne.s32.totalorder %s134, %s136
      %p140 = scmp.eq.s32.totalorder %s16, 0
      %p141 = por %p139, %p140
      %p142 = scmp.ne.s32.totalorder %s134, %s136
      %p143 = scmp.eq.s32.totalorder %s21, 1
      %p144 = por %p142, %p143
      %p145 = scmp.ne.s32.totalorder %s136, %s137
      %p146 = scmp.eq.s32.totalorder %s21, 0
      %p147 = por %p145, %p146
      %p148 = scmp.ne.s32.totalorder %s136, %s137
      %p149 = scmp.eq.s32.totalorder %s22, 1
      %p150 = por %p148, %p149
      %p152 = scmp.ne.s32.totalorder %s137, %s151
      %p153 = scmp.eq.s32.totalorder %s22, 0
      %p154 = por %p152, %p153
      %s156 = sadd.s32 %s155, 1
      %p159 = scmp.eq.s32.totalorder %s16, 1
      %p160 = scmp.ne.s32.totalorder %s155, %s157
      %p161 = scmp.eq.s32.totalorder %s16, 0
      %p162 = por %p160, %p161
      %p163 = scmp.ne.s32.totalorder %s155, %s157
      %p164 = scmp.eq.s32.totalorder %s21, 1
      %p165 = por %p163, %p164
      %p166 = scmp.ne.s32.totalorder %s157, %s158
      %p167 = scmp.eq.s32.totalorder %s21, 0
      %p168 = por %p166, %p167
      %p169 = scmp.ne.s32.totalorder %s157, %s158
      %p170 = scmp.eq.s32.totalorder %s22, 1
      %p171 = por %p169, %p170
      %p173 = scmp.ne.s32.totalorder %s158, %s172
      %p174 = scmp.eq.s32.totalorder %s22, 0
      %p175 = por %p173, %p174
      %s176 = ssub.s32 %s16, %s23
      %p177 = scmp.eq.s32.totalorder %s176, 0
      %s179 = sadd.s32 %s178, 1
      %s180 = scalar_select %p177, %s178, %s179
      %p183 = pneg %p177
      %p184 = scmp.eq.s32.totalorder %s16, 1
      %p185 = por %p183, %p184
      %p186 = scmp.ne.s32.totalorder %s178, %s181
      %p187 = scmp.eq.s32.totalorder %s16, 0
      %p188 = por %p186, %p187
      %p189 = scmp.ne.s32.totalorder %s178, %s181
      %p190 = scmp.eq.s32.totalorder %s21, 1
      %p191 = por %p189, %p190
      %p192 = scmp.ne.s32.totalorder %s181, %s182
      %p193 = scmp.eq.s32.totalorder %s21, 0
      %p194 = por %p192, %p193
      %p195 = scmp.ne.s32.totalorder %s181, %s182
      %p196 = scmp.eq.s32.totalorder %s22, 1
      %p197 = por %p195, %p196
      %p199 = scmp.ne.s32.totalorder %s182, %s198
      %p200 = scmp.eq.s32.totalorder %s22, 0
      %p201 = por %p199, %p200
      %p202 = scmp.le.s32.totalorder 1, %s16
      %p203 = scmp.lt.s32.totalorder %s16, 3
      %p204 = pnand %p202, %p203
      %p205 = pneg %p204
      // Predicated region
      $region9: #{prenorm_ffn_pallas.1} parent=5 // pred_check
        _
      $region10: #{prenorm_ffn_pallas.1} parent=5 // pred_check_branch
        %207 = sbr.rel (%p204) target = $region12
      $region11: #{prenorm_ffn_pallas.1} parent=5 // pred_region
        %s208 = ssub.s32 %s16, 1
        // Predicated region
        $region13: #{prenorm_ffn_pallas.1} parent=11 // pred_check
          %p209 = pneg %p63
        $region14: #{prenorm_ffn_pallas.1} parent=11 // pred_check_branch
          %211 = sbr.rel (%p209) target = $region16
        $region15: #{prenorm_ffn_pallas.1} parent=11 // pred_region
          _
        $region16: #{prenorm_ffn_pallas.1} parent=11 // pred_fallthru
          _
        // Predicated region
        $region17: #{prenorm_ffn_pallas.1} parent=11 // pred_check
          %p212 = pneg %p84
        $region18: #{prenorm_ffn_pallas.1} parent=11 // pred_check_branch
          %214 = sbr.rel (%p212) target = $region20
        $region19: #{prenorm_ffn_pallas.1} parent=11 // pred_region
          _
        $region20: #{prenorm_ffn_pallas.1} parent=11 // pred_fallthru
          _
        // Predicated region
        $region21: #{prenorm_ffn_pallas.1} parent=11 // pred_check
          %p215 = pneg %p105
        $region22: #{prenorm_ffn_pallas.1} parent=11 // pred_check_branch
          %217 = sbr.rel (%p215) target = $region24
        $region23: #{prenorm_ffn_pallas.1} parent=11 // pred_region
          _
        $region24: #{prenorm_ffn_pallas.1} parent=11 // pred_fallthru
          _
        // Predicated region
        $region25: #{prenorm_ffn_pallas.1} parent=11 // pred_check
          %p218 = pneg %p126
        $region26: #{prenorm_ffn_pallas.1} parent=11 // pred_check_branch
          %220 = sbr.rel (%p218) target = $region28
        $region27: #{prenorm_ffn_pallas.1} parent=11 // pred_region
          _
        $region28: #{prenorm_ffn_pallas.1} parent=11 // pred_fallthru
          _
        // Predicated region
        $region29: #{prenorm_ffn_pallas.1} parent=11 // pred_check
          %p221 = pneg %p147
        $region30: #{prenorm_ffn_pallas.1} parent=11 // pred_check_branch
          %223 = sbr.rel (%p221) target = $region32
        $region31: #{prenorm_ffn_pallas.1} parent=11 // pred_region
          _
        $region32: #{prenorm_ffn_pallas.1} parent=11 // pred_fallthru
          _
        // Predicated region
        $region33: #{prenorm_ffn_pallas.1} parent=11 // pred_check
          %p224 = pneg %p168
        $region34: #{prenorm_ffn_pallas.1} parent=11 // pred_check_branch
          %226 = sbr.rel (%p224) target = $region36
        $region35: #{prenorm_ffn_pallas.1} parent=11 // pred_region
          _
        $region36: #{prenorm_ffn_pallas.1} parent=11 // pred_fallthru
          _
      $region12: #{prenorm_ffn_pallas.1} parent=5 // pred_fallthru
        _
      %p227 = scmp.lt.s32.totalorder %s16, 2
      // Predicated region
      $region37: #{prenorm_ffn_pallas.1} parent=5 // pred_check
        %p228 = pneg %p227
      $region38: #{prenorm_ffn_pallas.1} parent=5 // pred_check_branch
        %230 = sbr.rel (%p228) target = $region40
      $region39: #{prenorm_ffn_pallas.1} parent=5 // pred_region
        // Predicated region
        $region41: #{prenorm_ffn_pallas.1} parent=39 // pred_check
          %p231 = pneg %p36
        $region42: #{prenorm_ffn_pallas.1} parent=39 // pred_check_branch
          %233 = sbr.rel (%p231) target = $region44
        $region43: #{prenorm_ffn_pallas.1} parent=39 // pred_region
          %s234 = smul.u32 8, %s16
          %p235 = scmp.lt.s32.totalorder %s234, 15
          %s236 = scalar_select %p235, %s234, 15
          %s237 = smul.addr %s236, 4
          %s238 = scalar_lea.vmem %s0, %s237
          %s239 = smul.u32 8, %s16
        $region44: #{prenorm_ffn_pallas.1} parent=39 // pred_fallthru
          _
      $region40: #{prenorm_ffn_pallas.1} parent=5 // pred_fallthru
        _
      %p240 = scmp.le.s32.totalorder 1, %s16
      %p241 = scmp.lt.s32.totalorder %s16, 3
      %p242 = pnand %p240, %p241
      %p243 = pneg %p242
      // Predicated region
      $region45: #{prenorm_ffn_pallas.1} parent=5 // pred_check
        _
      $region46: #{prenorm_ffn_pallas.1} parent=5 // pred_check_branch
        %245 = sbr.rel (%p242) target = $region48
      $region47: #{prenorm_ffn_pallas.1} parent=5 // pred_region
        %s246 = ssub.s32 %s16, 1
        %s247 = smul.u32 8, %s21
        %p248 = scmp.lt.s32.totalorder %s247, 15
        %s249 = scalar_select %p248, %s247, 15
        %s250 = smul.addr %s249, 4
        %s251 = scalar_lea.vmem %s0, %s250
        %p252 = pneg %p42
        %p253 = pneg %p39
        %p254 = pneg %p63
        %p255 = pneg %p60
        %p256 = pneg %p84
        %p257 = pneg %p81
        %p258 = pneg %p105
        %p259 = pneg %p102
        %p260 = pneg %p126
        %p261 = pneg %p123
        %p262 = pneg %p147
        %p263 = pneg %p144
        %p264 = pneg %p168
        %p265 = pneg %p165
        %p266 = pneg %p194
        %p267 = pneg %p191
        %s268 = sand.u32 %s181, 1
        %s269 = scalar_lea.sflag [#allocation3], %s268
        %s270 = sand.u32 %s181, 1
        %s271 = smul.addr %s270, 32
        %s272 = scalar_lea.vmem [#allocation2], %s271
        %s273 = smul.u32 8, %s21
        %p274 = scmp.lt.s32.totalorder %s273, 15
        %s275 = scalar_select %p274, %s273, 15
        %s276 = smul.addr %s275, 4
        %s277 = scalar_lea.vmem %s0, %s276
        %s278 = smul.u32 8, %s21
        %s279 = smul.u32 8, %s21
        %v281 = vld [vmem:[%s277] sm:$0xf]
        %v282 = vld [vmem:[%s277 + $0x4] sm:$0xf]
        %v283 = vld [vmem:[%s277 + $0x8] sm:$0xf]
        %v284 = vld [vmem:[%s277 + $0xc] sm:$0xf]
        %v285 = vld [vmem:[%s277 + $0x10] sm:$0xf]
        %v286 = vld [vmem:[%s277 + $0x14] sm:$0xf]
        %v287 = vld [vmem:[%s277 + $0x18] sm:$0xf]
        %v288 = vld [vmem:[%s277 + $0x1c] sm:$0xf]
        %v289 = vunpack.c.l.bf16 %v281
        %v290 = vunpack.c.l.bf16 %v282
        %v291 = vunpack.c.l.bf16 %v283
        %v292 = vunpack.c.l.bf16 %v284
        %v293 = vunpack.c.l.bf16 %v285
        %v294 = vunpack.c.l.bf16 %v286
        %v295 = vunpack.c.l.bf16 %v287
        %v296 = vunpack.c.l.bf16 %v288
        %vm297 = vcmask 261120
        %v298 = vsel %vm297, %v289, 0.0
        %299 = vadd.xlane.f32.xlu0 %v298
        %v300 = vpop.xlane.xlu0 %299
        %v301 = vsel %vm297, %v290, 0.0
        %302 = vadd.xlane.f32.xlu0 %v301
        %v303 = vpop.xlane.xlu0 %302
        %v304 = vsel %vm297, %v291, 0.0
        %305 = vadd.xlane.f32.xlu0 %v304
        %v306 = vpop.xlane.xlu0 %305
        %v307 = vsel %vm297, %v292, 0.0
        %308 = vadd.xlane.f32.xlu0 %v307
        %v309 = vpop.xlane.xlu0 %308
        %v310 = vsel %vm297, %v293, 0.0
        %311 = vadd.xlane.f32.xlu0 %v310
        %v312 = vpop.xlane.xlu0 %311
        %v313 = vsel %vm297, %v294, 0.0
        %314 = vadd.xlane.f32.xlu0 %v313
        %v315 = vpop.xlane.xlu0 %314
        %v316 = vsel %vm297, %v295, 0.0
        %317 = vadd.xlane.f32.xlu0 %v316
        %v318 = vpop.xlane.xlu0 %317
        %v319 = vsel %vm297, %v296, 0.0
        %320 = vadd.xlane.f32.xlu0 %v319
        %v321 = vpop.xlane.xlu0 %320
        %v322 = vmul.f32 %v300, 0.03125
        %v323 = vmul.f32 %v303, 0.03125
        %v324 = vmul.f32 %v306, 0.03125
        %v325 = vmul.f32 %v309, 0.03125
        %v326 = vmul.f32 %v312, 0.03125
        %v327 = vmul.f32 %v315, 0.03125
        %v328 = vmul.f32 %v318, 0.03125
        %v329 = vmul.f32 %v321, 0.03125
        %v330 = vsub.f32 %v289, %v322
        %v331 = vsub.f32 %v290, %v323
        %v332 = vsub.f32 %v291, %v324
        %v333 = vsub.f32 %v292, %v325
        %v334 = vsub.f32 %v293, %v326
        %v335 = vsub.f32 %v294, %v327
        %v336 = vsub.f32 %v295, %v328
        %v337 = vsub.f32 %v296, %v329
        %v338 = vmul.f32 %v330, %v330
        %v339 = vmul.f32 %v331, %v331
        %v340 = vmul.f32 %v332, %v332
        %v341 = vmul.f32 %v333, %v333
        %v342 = vmul.f32 %v334, %v334
        %v343 = vmul.f32 %v335, %v335
        %v344 = vmul.f32 %v336, %v336
        %v345 = vmul.f32 %v337, %v337
        %v346 = vsel %vm297, %v338, 0.0
        %347 = vadd.xlane.f32.xlu0 %v346
        %v348 = vpop.xlane.xlu0 %347
        %v349 = vsel %vm297, %v339, 0.0
        %350 = vadd.xlane.f32.xlu0 %v349
        %v351 = vpop.xlane.xlu0 %350
        %v352 = vsel %vm297, %v340, 0.0
        %353 = vadd.xlane.f32.xlu0 %v352
        %v354 = vpop.xlane.xlu0 %353
        %v355 = vsel %vm297, %v341, 0.0
        %356 = vadd.xlane.f32.xlu0 %v355
        %v357 = vpop.xlane.xlu0 %356
        %v358 = vsel %vm297, %v342, 0.0
        %359 = vadd.xlane.f32.xlu0 %v358
        %v360 = vpop.xlane.xlu0 %359
        %v361 = vsel %vm297, %v343, 0.0
        %362 = vadd.xlane.f32.xlu0 %v361
        %v363 = vpop.xlane.xlu0 %362
        %v364 = vsel %vm297, %v344, 0.0
        %365 = vadd.xlane.f32.xlu0 %v364
        %v366 = vpop.xlane.xlu0 %365
        %v367 = vsel %vm297, %v345, 0.0
        %368 = vadd.xlane.f32.xlu0 %v367
        %v369 = vpop.xlane.xlu0 %368
        %v370 = vmul.f32 %v348, 0.03125
        %v371 = vmul.f32 %v351, 0.03125
        %v372 = vmul.f32 %v354, 0.03125
        %v373 = vmul.f32 %v357, 0.03125
        %v374 = vmul.f32 %v360, 0.03125
        %v375 = vmul.f32 %v363, 0.03125
        %v376 = vmul.f32 %v366, 0.03125
        %v377 = vmul.f32 %v369, 0.03125
        %v378 = vadd.f32 %v370, 1e-05
        %v379 = vadd.f32 %v371, 1e-05
        %v380 = vadd.f32 %v372, 1e-05
        %v381 = vadd.f32 %v373, 1e-05
        %v382 = vadd.f32 %v374, 1e-05
        %v383 = vadd.f32 %v375, 1e-05
        %v384 = vadd.f32 %v376, 1e-05
        %v385 = vadd.f32 %v377, 1e-05
        %v386 = vrsqrt.pop %v378
        %v387 = vrsqrt.pop %v379
        %v388 = vrsqrt.pop %v380
        %v389 = vrsqrt.pop %v381
        %v390 = vrsqrt.pop %v382
        %v391 = vrsqrt.pop %v383
        %v392 = vrsqrt.pop %v384
        %v393 = vrsqrt.pop %v385
        %v394 = vmul.f32 %v330, %v386
        %v395 = vmul.f32 %v331, %v387
        %v396 = vmul.f32 %v332, %v388
        %v397 = vmul.f32 %v333, %v389
        %v398 = vmul.f32 %v334, %v390
        %v399 = vmul.f32 %v335, %v391
        %v400 = vmul.f32 %v336, %v392
        %v401 = vmul.f32 %v337, %v393
        %v402 = vld [vmem:[%s1] sm:$0x1]
        %v404 = vlaneseq
        %v405 = vshrl.u32 %v404, 7
        %v406 = vsub.s32 0, %v405
        %v407 = vrot.slane %v402, %v406
        %v409 = vmul.f32 %v394, %v407
        %v410 = vmul.f32 %v395, %v407
        %v411 = vmul.f32 %v396, %v407
        %v412 = vmul.f32 %v397, %v407
        %v413 = vmul.f32 %v398, %v407
        %v414 = vmul.f32 %v399, %v407
        %v415 = vmul.f32 %v400, %v407
        %v416 = vmul.f32 %v401, %v407
        %v417 = vld [vmem:[%s2] sm:$0x1]
        %v419 = vlaneseq
        %v420 = vshrl.u32 %v419, 7
        %v421 = vsub.s32 0, %v420
        %v422 = vrot.slane %v417, %v421
        %v424 = vadd.f32 %v409, %v422
        %v425 = vadd.f32 %v410, %v422
        %v426 = vadd.f32 %v411, %v422
        %v427 = vadd.f32 %v412, %v422
        %v428 = vadd.f32 %v413, %v422
        %v429 = vadd.f32 %v414, %v422
        %v430 = vadd.f32 %v415, %v422
        %v431 = vadd.f32 %v416, %v422
        %v432 = vpack.c.bf16 %v425, %v424
        %v433 = vpack.c.bf16 %v427, %v426
        %v434 = vpack.c.bf16 %v429, %v428
        %v435 = vpack.c.bf16 %v431, %v430
        %v436 = vld [vmem:[%s3] sm:$0xf]
        %v437 = vld [vmem:[%s3 + $0x4] sm:$0xf]
        %v438 = vld [vmem:[%s3 + $0x8] sm:$0xf]
        %v439 = vld [vmem:[%s3 + $0xc] sm:$0xf]
        %v440 = vld [vmem:[%s4] sm:$0x1]
        %v442 = vlaneseq
        %v443 = vshrl.u32 %v442, 7
        %v444 = vsub.s32 0, %v443
        %v445 = vrot.slane %v440, %v444
        %v451 = vunpack.c.l.b16 %v436
        %v452 = vunpack.c.l.b16 %v437
        %v453 = vunpack.c.l.b16 %v438
        %v454 = vunpack.c.l.b16 %v439
        %v455 = vpack.c.b16 %v452, %v451
        %v456 = vpack.c.b16 %v454, %v453
        %v460 = vsel %vm297, %v432, 0
        %v463 = vsel %vm297, %v433, 0
        %v466 = vsel %vm297, %v434, 0
        %v469 = vsel %vm297, %v435, 0
        %471 = vmatprep.subr.bf16.mxu0 0
        %472 = vmatpush1.bf16.msra.mxu0 %v455
        %473 = vmatprep.subr.bf16.mxu0 0
        %474 = vmatpush1.bf16.msra.mxu0 %v456
        %475 = vmatprep.subr.bf16.mxu0 0
        %476 = vmatpush1.bf16.msra.mxu0 0
        %477 = vmatprep.subr.bf16.mxu0 0
        %478 = vmatpush1.bf16.msra.mxu0 0
        %479 = vmatprep.subr.bf16.mxu0 0
        %480 = vmatpush1.bf16.msra.mxu0 0
        %481 = vmatprep.subr.bf16.mxu0 0
        %482 = vmatpush1.bf16.msra.mxu0 0
        %483 = vmatprep.subr.bf16.mxu0 0
        %484 = vmatpush1.bf16.msra.mxu0 0
        %485 = vmatprep.subr.bf16.mxu0 0
        %486 = vmatpush1.bf16.msra.mxu0 0
        %487 = vmatprep.subr.bf16.mxu0 0
        %488 = vmatpush1.bf16.msra.mxu0 0
        %489 = vmatprep.subr.bf16.mxu0 0
        %490 = vmatpush1.bf16.msra.mxu0 0
        %491 = vmatprep.subr.bf16.mxu0 0
        %492 = vmatpush1.bf16.msra.mxu0 0
        %493 = vmatprep.subr.bf16.mxu0 0
        %494 = vmatpush1.bf16.msra.mxu0 0
        %495 = vmatprep.subr.bf16.mxu0 0
        %496 = vmatpush1.bf16.msra.mxu0 0
        %497 = vmatprep.subr.bf16.mxu0 0
        %498 = vmatpush1.bf16.msra.mxu0 0
        %499 = vmatprep.subr.bf16.mxu0 0
        %500 = vmatpush1.bf16.msra.mxu0 0
        %501 = vmatprep.subr.bf16.mxu0 0
        %502 = vmatpush1.bf16.msra.mxu0 0
        %503 = vmatprep.mubr.bf16.mxu0 0
        %504 = vmatmul.mubr.bf16.gmra.mrb[0].mxu0 %v460
        %v505 = vpop.f32.mrb[0].mxu0
        %v506 = vadd.f32 %v445, %v505
        %v507 = vpop.f32.mrb[0].mxu0
        %v508 = vpop.f32.mrb[0].mxu0
        %v509 = vadd.f32 %v445, %v508
        %v510 = vpop.f32.mrb[0].mxu0
        %511 = vmatprep.mubr.bf16.mxu0 0
        %512 = vmatmul.mubr.bf16.gmra.mrb[0].mxu0 %v463
        %v513 = vpop.f32.mrb[0].mxu0
        %v514 = vadd.f32 %v445, %v513
        %v515 = vpop.f32.mrb[0].mxu0
        %v516 = vpop.f32.mrb[0].mxu0
        %v517 = vadd.f32 %v445, %v516
        %v518 = vpop.f32.mrb[0].mxu0
        %519 = vmatprep.mubr.bf16.mxu0 0
        %520 = vmatmul.mubr.bf16.gmra.mrb[0].mxu0 %v466
        %v521 = vpop.f32.mrb[0].mxu0
        %v522 = vadd.f32 %v445, %v521
        %v523 = vpop.f32.mrb[0].mxu0
        %v524 = vpop.f32.mrb[0].mxu0
        %v525 = vadd.f32 %v445, %v524
        %v526 = vpop.f32.mrb[0].mxu0
        %527 = vmatprep.mubr.bf16.mxu0 0
        %528 = vmatmul.mubr.bf16.gmra.mrb[0].mxu0 %v469
        %v529 = vpop.f32.mrb[0].mxu0
        %v530 = vadd.f32 %v445, %v529
        %v531 = vpop.f32.mrb[0].mxu0
        %v532 = vpop.f32.mrb[0].mxu0
        %v533 = vadd.f32 %v445, %v532
        %v534 = vpop.f32.mrb[0].mxu0
        %535 = vdwg.mxu0
        %v536 = vxor.u32 %v506, 2147483648
        %v537 = vxor.u32 %v509, 2147483648
        %v538 = vxor.u32 %v514, 2147483648
        %v539 = vxor.u32 %v517, 2147483648
        %v540 = vxor.u32 %v522, 2147483648
        %v541 = vxor.u32 %v525, 2147483648
        %v542 = vxor.u32 %v530, 2147483648
        %v543 = vxor.u32 %v533, 2147483648
        %v544 = vmul.f32 %v536, 1.442695
        %v545 = vpow.pop %v544
        %v546 = vmul.f32 %v537, 1.442695
        %v547 = vpow.pop %v546
        %v548 = vmul.f32 %v538, 1.442695
        %v549 = vpow.pop %v548
        %v550 = vmul.f32 %v539, 1.442695
        %v551 = vpow.pop %v550
        %v552 = vmul.f32 %v540, 1.442695
        %v553 = vpow.pop %v552
        %v554 = vmul.f32 %v541, 1.442695
        %v555 = vpow.pop %v554
        %v556 = vmul.f32 %v542, 1.442695
        %v557 = vpow.pop %v556
        %v558 = vmul.f32 %v543, 1.442695
        %v559 = vpow.pop %v558
        %v560 = vadd.f32 %v545, 1.0
        %v561 = vadd.f32 %v547, 1.0
        %v562 = vadd.f32 %v549, 1.0
        %v563 = vadd.f32 %v551, 1.0
        %v564 = vadd.f32 %v553, 1.0
        %v565 = vadd.f32 %v555, 1.0
        %v566 = vadd.f32 %v557, 1.0
        %v567 = vadd.f32 %v559, 1.0
        %v568 = vrcp.pop %v560
        %v569 = vmul.f32 1.0, %v568
        %v570 = vrcp.pop %v561
        %v571 = vmul.f32 1.0, %v570
        %v572 = vrcp.pop %v562
        %v573 = vmul.f32 1.0, %v572
        %v574 = vrcp.pop %v563
        %v575 = vmul.f32 1.0, %v574
        %v576 = vrcp.pop %v564
        %v577 = vmul.f32 1.0, %v576
        %v578 = vrcp.pop %v565
        %v579 = vmul.f32 1.0, %v578
        %v580 = vrcp.pop %v566
        %v581 = vmul.f32 1.0, %v580
        %v582 = vrcp.pop %v567
        %v583 = vmul.f32 1.0, %v582
        %v584 = vmul.f32 %v506, %v569
        %v585 = vmul.f32 %v509, %v571
        %v586 = vmul.f32 %v514, %v573
        %v587 = vmul.f32 %v517, %v575
        %v588 = vmul.f32 %v522, %v577
        %v589 = vmul.f32 %v525, %v579
        %v590 = vmul.f32 %v530, %v581
        %v591 = vmul.f32 %v533, %v583
        %v592 = vpack.c.bf16 %v585, %v584
        %v593 = vpack.c.bf16 %v587, %v586
        %v594 = vpack.c.bf16 %v589, %v588
        %v595 = vpack.c.bf16 %v591, %v590
        %v596 = vld [vmem:[%s5] sm:$0xf]
        %v597 = vld [vmem:[%s5 + $0x4] sm:$0xf]
        %v598 = vld [vmem:[%s5 + $0x8] sm:$0xf]
        %v599 = vld [vmem:[%s5 + $0xc] sm:$0xf]
        %v600 = vld [vmem:[%s5 + $0x10] sm:$0xf]
        %v601 = vld [vmem:[%s5 + $0x14] sm:$0xf]
        %v602 = vld [vmem:[%s5 + $0x18] sm:$0xf]
        %v603 = vld [vmem:[%s5 + $0x1c] sm:$0xf]
        %v604 = vld [vmem:[%s6] sm:$0x1]
        %v606 = vlaneseq
        %v607 = vshrl.u32 %v606, 7
        %v608 = vsub.s32 0, %v607
        %v609 = vrot.slane %v604, %v608
        %v619 = vunpack.c.l.b16 %v596
        %v620 = vunpack.c.l.b16 %v597
        %v621 = vunpack.c.l.b16 %v598
        %v622 = vunpack.c.l.b16 %v599
        %v623 = vunpack.c.l.b16 %v600
        %v624 = vunpack.c.l.b16 %v601
        %v625 = vunpack.c.l.b16 %v602
        %v626 = vunpack.c.l.b16 %v603
        %v627 = vpack.c.b16 %v620, %v619
        %v628 = vpack.c.b16 %v622, %v621
        %v629 = vpack.c.b16 %v624, %v623
        %v630 = vpack.c.b16 %v626, %v625
        %vm635 = vcmask 523264
        %v637 = vsel %vm635, %v592, 0
        %v640 = vsel %vm635, %v593, 0
        %v643 = vsel %vm635, %v594, 0
        %v646 = vsel %vm635, %v595, 0
        %648 = vmatprep.subr.bf16.mxu0 0
        %649 = vmatpush1.bf16.msra.mxu0 %v627
        %650 = vmatprep.subr.bf16.mxu0 0
        %651 = vmatpush1.bf16.msra.mxu0 %v628
        %652 = vmatprep.subr.bf16.mxu0 0
        %653 = vmatpush1.bf16.msra.mxu0 %v629
        %654 = vmatprep.subr.bf16.mxu0 0
        %655 = vmatpush1.bf16.msra.mxu0 %v630
        %656 = vmatprep.subr.bf16.mxu0 0
        %657 = vmatpush1.bf16.msra.mxu0 0
        %658 = vmatprep.subr.bf16.mxu0 0
        %659 = vmatpush1.bf16.msra.mxu0 0
        %660 = vmatprep.subr.bf16.mxu0 0
        %661 = vmatpush1.bf16.msra.mxu0 0
        %662 = vmatprep.subr.bf16.mxu0 0
        %663 = vmatpush1.bf16.msra.mxu0 0
        %664 = vmatprep.subr.bf16.mxu0 0
        %665 = vmatpush1.bf16.msra.mxu0 0
        %666 = vmatprep.subr.bf16.mxu0 0
        %667 = vmatpush1.bf16.msra.mxu0 0
        %668 = vmatprep.subr.bf16.mxu0 0
        %669 = vmatpush1.bf16.msra.mxu0 0
        %670 = vmatprep.subr.bf16.mxu0 0
        %671 = vmatpush1.bf16.msra.mxu0 0
        %672 = vmatprep.subr.bf16.mxu0 0
        %673 = vmatpush1.bf16.msra.mxu0 0
        %674 = vmatprep.subr.bf16.mxu0 0
        %675 = vmatpush1.bf16.msra.mxu0 0
        %676 = vmatprep.subr.bf16.mxu0 0
        %677 = vmatpush1.bf16.msra.mxu0 0
        %678 = vmatprep.subr.bf16.mxu0 0
        %679 = vmatpush1.bf16.msra.mxu0 0
        %680 = vmatprep.mubr.bf16.mxu0 0
        %681 = vmatmul.mubr.bf16.gmra.mrb[0].mxu0 %v637
        %v682 = vpop.f32.mrb[0].mxu0
        %v683 = vadd.f32 %v609, %v682
        %v684 = vpop.f32.mrb[0].mxu0
        %v685 = vpop.f32.mrb[0].mxu0
        %v686 = vadd.f32 %v609, %v685
        %v687 = vpop.f32.mrb[0].mxu0
        %688 = vmatprep.mubr.bf16.mxu0 0
        %689 = vmatmul.mubr.bf16.gmra.mrb[0].mxu0 %v640
        %v690 = vpop.f32.mrb[0].mxu0
        %v691 = vadd.f32 %v609, %v690
        %v692 = vpop.f32.mrb[0].mxu0
        %v693 = vpop.f32.mrb[0].mxu0
        %v694 = vadd.f32 %v609, %v693
        %v695 = vpop.f32.mrb[0].mxu0
        %696 = vmatprep.mubr.bf16.mxu0 0
        %697 = vmatmul.mubr.bf16.gmra.mrb[0].mxu0 %v643
        %v698 = vpop.f32.mrb[0].mxu0
        %v699 = vadd.f32 %v609, %v698
        %v700 = vpop.f32.mrb[0].mxu0
        %v701 = vpop.f32.mrb[0].mxu0
        %v702 = vadd.f32 %v609, %v701
        %v703 = vpop.f32.mrb[0].mxu0
        %704 = vmatprep.mubr.bf16.mxu0 0
        %705 = vmatmul.mubr.bf16.gmra.mrb[0].mxu0 %v646
        %v706 = vpop.f32.mrb[0].mxu0
        %v707 = vadd.f32 %v609, %v706
        %v708 = vpop.f32.mrb[0].mxu0
        %v709 = vpop.f32.mrb[0].mxu0
        %v710 = vadd.f32 %v609, %v709
        %v711 = vpop.f32.mrb[0].mxu0
        %712 = vdwg.mxu0
        %v713 = vpack.c.bf16 %v686, %v683
        %v714 = vpack.c.bf16 %v694, %v691
        %v715 = vpack.c.bf16 %v702, %v699
        %v716 = vpack.c.bf16 %v710, %v707
        %v721 = vunpack.c.l.b16 %v713
        %v722 = vunpack.c.h.b16 %v713
        %v723 = vunpack.c.l.b16 %v714
        %v724 = vunpack.c.h.b16 %v714
        %v725 = vunpack.c.l.b16 %v715
        %v726 = vunpack.c.h.b16 %v715
        %v727 = vunpack.c.l.b16 %v716
        %v728 = vunpack.c.h.b16 %v716
        %v729 = vpack.c.b16 %v721, %v721
        %v730 = vpack.c.b16 %v722, %v722
        %v731 = vpack.c.b16 %v723, %v723
        %v732 = vpack.c.b16 %v724, %v724
        %v733 = vpack.c.b16 %v725, %v725
        %v734 = vpack.c.b16 %v726, %v726
        %v735 = vpack.c.b16 %v727, %v727
        %v736 = vpack.c.b16 %v728, %v728
        %vm745 = vcmask 257024
        %746 = vst.msk [vmem:[%s272] sm:$0xf] %vm745, %v729
        %747 = vst.msk [vmem:[%s272 + $0x4] sm:$0xf] %vm745, %v730
        %748 = vst.msk [vmem:[%s272 + $0x8] sm:$0xf] %vm745, %v731
        %749 = vst.msk [vmem:[%s272 + $0xc] sm:$0xf] %vm745, %v732
        %750 = vst.msk [vmem:[%s272 + $0x10] sm:$0xf] %vm745, %v733
        %751 = vst.msk [vmem:[%s272 + $0x14] sm:$0xf] %vm745, %v734
        %752 = vst.msk [vmem:[%s272 + $0x18] sm:$0xf] %vm745, %v735
        %753 = vst.msk [vmem:[%s272 + $0x1c] sm:$0xf] %vm745, %v736
        %s754 = sand.u32 %s181, 1
        %s755 = scalar_lea.sflag [#allocation3], %s754
        %s756 = sand.u32 %s181, 1
        %s757 = smul.addr %s756, 32
        %s758 = scalar_lea.vmem [#allocation2], %s757
        // Predicated region
        $region49: #{prenorm_ffn_pallas.1} parent=47 // pred_check
          %p759 = pneg %p191
        $region50: #{prenorm_ffn_pallas.1} parent=47 // pred_check_branch
          %761 = sbr.rel (%p759) target = $region52
        $region51: #{prenorm_ffn_pallas.1} parent=47 // pred_region
          %s762 = smul.u32 8, %s21
          %s764 = ssub.s32 512, 512
          %765 = vsyncadd %s755, %s764
          %s766 = smul.addr %s762, 64
          %s767 = scalar_lea.hbm %s7, %s766
          %s768 = sshll.u32 %s758, 4
          %s769 = int_to_ptr.vmem [resolvable:$true] %s768
          %774 = dma.vmem_to_hbm [thread:$0]  %s769, 512, %s767, %s755, 64, 64, 4
        $region52: #{prenorm_ffn_pallas.1} parent=47 // pred_fallthru
          _
      $region48: #{prenorm_ffn_pallas.1} parent=5 // pred_fallthru
        _
      %p775 = scmp.le.s32.totalorder 2, %s16
      // Predicated region
      $region53: #{prenorm_ffn_pallas.1} parent=5 // pred_check
        %p776 = pneg %p775
      $region54: #{prenorm_ffn_pallas.1} parent=5 // pred_check_branch
        %778 = sbr.rel (%p776) target = $region56
      $region55: #{prenorm_ffn_pallas.1} parent=5 // pred_region
        %s779 = ssub.s32 %s16, 2
        // Predicated region
        $region57: #{prenorm_ffn_pallas.1} parent=55 // pred_check
          %p780 = pneg %p197
        $region58: #{prenorm_ffn_pallas.1} parent=55 // pred_check_branch
          %782 = sbr.rel (%p780) target = $region60
        $region59: #{prenorm_ffn_pallas.1} parent=55 // pred_region
          %s783 = sand.u32 %s182, 1
          %s784 = scalar_lea.sflag [#allocation3], %s783
          %s785 = sand.u32 %s182, 1
          %s786 = smul.addr %s785, 32
          %s787 = scalar_lea.vmem [#allocation2], %s786
          %788 = dma.done %s784, 512
        $region60: #{prenorm_ffn_pallas.1} parent=55 // pred_fallthru
          _
      $region56: #{prenorm_ffn_pallas.1} parent=5 // pred_fallthru
        _
    $region6: #{prenorm_ffn_pallas.1} parent=1 // loop_footer
      %s20 = sadd.s32 1, %s16
    $region7: #{prenorm_ffn_pallas.1} parent=1 // loop_footer_branch
      %15 = sbr.rel target = $region3
    $region8: #{prenorm_ffn_pallas.1} parent=1 // loop_exit
      _
    %789 = vsyncpa [#allocation3], 1
    %s790 = scalar_lea.sflag [#allocation3], 1
    %791 = vsyncpa %s790, 1

</llo_original>
